<compile_context>
chip_gen: v7x
topology: tpu7x:2x2x1
jax: 0.10.0
libtpu: 0.0.40
codegen_flags: <defaults>
</compile_context>

<pallas_src>
import jax
import jax.numpy as jnp
from jax import lax
from jax.experimental import pallas as pl
from jax.experimental.pallas import tpu as pltpu

_KSIZE = 3
_LANE = 128
_WCHUNK = _KSIZE * _LANE          # 384 input lanes -> 128 output lanes per chunk
_PALLAS_MIN_ELEMENTS = 1 << 16    # below this, reduce_window beats kernel launch


def _vmem_capacity_bytes() -> int:
    """Per-generation VMEM capacity (64 MiB/TC on v7x, 128 MiB on v5e/v6e)."""
    try:
        cap = getattr(pltpu.get_tpu_info(), "vmem_capacity_bytes", None)
        if cap:
            return int(cap)
    except Exception:
        pass
    return 64 * 1024 * 1024       # conservative default (v7x per-TC)


def _maxpool_kernel(x_ref, o_ref):
    """One (channels, output-rows) tile of 3x3/stride-3 max pooling, NCHW layout.

    x_ref: (tnc, Rb, W)  input rows for this tile (W = full width -> lanes)
    o_ref: (tnc, Ob, Wo) pooled output rows

    H window: elementwise max of the 3 input rows per output row (VPU).
    W window: period-3 lane decimation via 0/1 selection matmuls (idle MXU),
              chunked 384->128 lanes, then elementwise maxes.
    """
    tnc, _, W = x_ref.shape
    _, Ob, Wo = o_ref.shape
    k = _KSIZE

    x = x_ref[...]                                     # (tnc, Rb, W)

    # --- H-window reduction: per output row, max of its 3 input rows (VPU).
    rows = []
    for r in range(Ob):
        h = x[:, k * r, :].astype(jnp.float32)
        for dh in range(1, k):
            h = jnp.maximum(h, x[:, k * r + dh, :].astype(jnp.float32))
        rows.append(h)                                 # (tnc, W) each
    h_all = jnp.concatenate(rows, axis=0) if Ob > 1 else rows[0]   # (Ob*tnc, W)

    # --- W-window reduction: decimate lanes with 0/1 selection matmuls.
    # out[:, j] = max_dw h_all[:, 3*j + dw]; chunking keeps MXU flops bounded
    # (<= 2*128 flops per input element) and sel matrices small.
    outs = []
    for c in range(pl.cdiv(Wo, _LANE)):
        j0, k0 = c * _LANE, c * _WCHUNK
        woc = min(_LANE, Wo - j0)
        wc = min(_WCHUNK, W - k0)
        hc = h_all[:, k0:k0 + wc]                      # 128-aligned lane slice
        kk = lax.broadcasted_iota(jnp.int32, (wc, woc), 0)
        jj = lax.broadcasted_iota(jnp.int32, (wc, woc), 1)
        acc = None
        for dw in range(k):
            sel = (kk == k * jj + dw).astype(jnp.float32)
            d = jnp.dot(hc, sel, preferred_element_type=jnp.float32)
            acc = d if acc is None else jnp.maximum(acc, d)
        outs.append(acc)                               # (Ob*tnc, woc)
    out = jnp.concatenate(outs, axis=-1) if len(outs) > 1 else outs[0]

    # --- Scatter rows back to the (tnc, Ob, Wo) NCHW output block.
    for r in range(Ob):
        o_ref[:, r, :] = out[r * tnc:(r + 1) * tnc, :].astype(o_ref.dtype)


def _plan_tiles(NC, H, W, Ho, Wo, isz):
    """Pick (tnc, Ob, Rb, vmem_limit) or None to fall back to XLA."""
    cap = _vmem_capacity_bytes()
    vmem_limit = min((cap * 3) // 4, 96 * 1024 * 1024)      # 48 MiB on v7x
    block_budget = min(cap // 4, 32 * 1024 * 1024)          # 16 MiB on v7x

    # Sublane multiple for the second-to-last block dims: 8 (f32) / 16 (bf16).
    sub = max(8, 32 // isz)
    if Ho >= sub:
        Ob = sub
        # Grow the row tile (multiples of sub) while keeping >= 8 row tiles for
        # pipelining / megacore; cap at 32 to bound unrolled in-kernel code.
        while Ob * 2 <= 32 and Ho // (Ob * 2) >= 8:
            Ob *= 2
        Rb = _KSIZE * Ob                                 # multiple of sub
    else:
        Ob, Rb = Ho, H                                   # full-dim blocks: legal

    def tile_bytes(tnc):
        in_blk = tnc * Rb * W * isz
        out_blk = tnc * Ob * Wo * isz
        # f32 temporaries: H-reduced rows, decimated output, selection matrices;
        # plus one extra input-block for the in-kernel value load.
        f32_tmp = 4 * (Ob * tnc * (W + 2 * Wo) + 3 * _WCHUNK * _LANE)
        return 2 * (in_blk + out_blk) + in_blk + f32_tmp   # x2 = double buffer

    if tile_bytes(1) > block_budget:
        return None                                      # let XLA handle it

    tnc = 1
    while tnc < NC and tile_bytes(min(2 * tnc, NC)) <= block_budget:
        tnc = min(2 * tnc, NC)

    # v7x megacore: ensure at least 2 grid steps to shard when possible.
    if pl.cdiv(Ho, Ob) == 1 and pl.cdiv(NC, tnc) == 1 and NC > 1:
        tnc = pl.cdiv(NC, 2)
    return tnc, Ob, Rb, vmem_limit


def _reference_maxpool(x_nchw: jax.Array) -> jax.Array:
    """Pure-JAX reference / fallback path (reduce_window on NCHW in place)."""
    dt = x_nchw.dtype
    if jnp.issubdtype(dt, jnp.floating):
        init = jnp.array(-jnp.inf, dt)
    else:
        init = jnp.array(jnp.iinfo(dt).min, dt)
    return lax.reduce_window(
        x_nchw, init, lax.max,
        window_dimensions=(1, 1, _KSIZE, _KSIZE),
        window_strides=(1, 1, _KSIZE, _KSIZE),
        padding="VALID")


def maxpool2d_3x3(x_nchw: jax.Array, *, use_pallas: bool | None = None,
                  channels_block: int | None = None) -> jax.Array:
    """MaxPool2d(kernel_size=3), stride=3, padding=0, ceil_mode=False.

    x_nchw: (N, C, H, W) -> (N, C, H//3, W//3).  `channels_block` is a test
    knob overriding the channel tile.
    """
    N, C, H, W = x_nchw.shape
    Ho, Wo = H // _KSIZE, W // _KSIZE
    dtype = x_nchw.dtype
    if Ho == 0 or Wo == 0:
        return jnp.zeros((N, C, Ho, Wo), dtype=dtype)

    is_float = jnp.issubdtype(dtype, jnp.floating)
    if use_pallas is None:
        use_pallas = is_float and (N * C * H * W) >= _PALLAS_MIN_ELEMENTS
    use_pallas = bool(use_pallas) and is_float   # MXU decimation needs floats
    if not use_pallas:
        return _reference_maxpool(x_nchw)

    NC = N * C
    isz = jnp.dtype(dtype).itemsize
    plan = _plan_tiles(NC, H, W, Ho, Wo, isz)
    if plan is None:
        return _reference_maxpool(x_nchw)
    tnc, Ob, Rb, vmem_limit = plan
    if channels_block is not None:
        tnc = max(1, min(NC, int(channels_block)))

    x3 = x_nchw.reshape(NC, H, W)                # free: no data movement
    out3 = pl.pallas_call(
        _maxpool_kernel,
        out_shape=jax.ShapeDtypeStruct((NC, Ho, Wo), dtype),
        grid=(pl.cdiv(NC, tnc), pl.cdiv(Ho, Ob)),
        in_specs=[pl.BlockSpec((tnc, Rb, W), lambda i, j: (i, j, 0))],
        out_specs=pl.BlockSpec((tnc, Ob, Wo), lambda i, j: (i, j, 0)),
        compiler_params=pltpu.CompilerParams(
            dimension_semantics=("parallel", "parallel"),
            vmem_limit_bytes=vmem_limit),
    )(x3)
    return out3.reshape(N, C, Ho, Wo)


class SimpleNN:
    """JAX/Pallas port of the PyTorch SimpleNN (a single MaxPool2d(3))."""

    def __init__(self) -> None:
        # MaxPool2d has no parameters; nothing to initialize.
        pass

    def __call__(self, x_nchw: jax.Array) -> jax.Array:
        return maxpool2d_3x3(x_nchw)


if __name__ == "__main__":
    key = jax.random.PRNGKey(0)
    k1, k2, k3, k4, k5 = jax.random.split(key, 5)

    # Spec-sized demo: (N, C, H, W) = (2, 4, 16, 16) -> (2, 4, 5, 5); exercises
    # the floor-mode crop (16 -> 5) and the forced 2-step channel grid.
    x = jax.random.normal(k1, (2, 4, 16, 16), dtype=jnp.float32)
    y = jax.block_until_ready(maxpool2d_3x3(x, use_pallas=True))
    assert y.shape == (2, 4, 5, 5), y.shape
    assert jnp.allclose(y, _reference_maxpool(x)), "maxpool mismatch"

    # Non-multiple-of-3 spatial dims + explicit channel tiling (partial blocks).
    x2 = jax.random.normal(k2, (2, 4, 22, 17), dtype=jnp.float32)
    y2 = jax.block_until_ready(maxpool2d_3x3(x2, use_pallas=True,
                                             channels_block=3))
    assert y2.shape == (2, 4, 7, 5), y2.shape
    assert jnp.allclose(y2, _reference_maxpool(x2)), "cropped maxpool mismatch"

    # Row-tiled path (Ho >= 8): Ob=8 row tiles, partial last row block.
    x3 = jax.random.normal(k3, (1, 3, 51, 40), dtype=jnp.float32)
    y3 = jax.block_until_ready(maxpool2d_3x3(x3, use_pallas=True))
    assert y3.shape == (1, 3, 17, 13), y3.shape
    assert jnp.allclose(y3, _reference_maxpool(x3)), "row-tiled maxpool mismatch"

    # bf16 end-to-end (memory-bound: keep the narrow dtype in HBM).
    x4 = jax.random.normal(k4, (2, 4, 24, 24), dtype=jnp.bfloat16)
    y4 = jax.block_until_ready(maxpool2d_3x3(x4, use_pallas=True))
    assert y4.dtype == jnp.bfloat16
    assert jnp.array_equal(y4, _reference_maxpool(x4)), "bf16 maxpool mismatch"

    # Wide image: exercises the 384->128 lane-chunked W-window decimation.
    x5 = jax.random.normal(k5, (1, 2, 9, 500), dtype=jnp.float32)
    y5 = jax.block_until_ready(maxpool2d_3x3(x5, use_pallas=True))
    assert y5.shape == (1, 2, 3, 166), y5.shape
    assert jnp.allclose(y5, _reference_maxpool(x5)), "chunked maxpool mismatch"

    # Module-style call (auto dispatch; tiny input takes the fast path).
    y_mod = jax.block_until_ready(SimpleNN()(x))
    assert jnp.allclose(y_mod, _reference_maxpool(x)), "module path mismatch"

    print("KERNEL_OK")
</pallas_src>

<mosaic_0001>
module attributes {stable_mosaic.version = 11 : i64} {
  func.func @_maxpool_kernel(%arg0: i32, %arg1: i32, %arg2: memref<4x16x16xf32, #tpu.memory_space<vmem>>, %arg3: memref<4x5x5xf32, #tpu.memory_space<vmem>>) attributes {dimension_semantics = [#tpu.dimension_semantics<parallel>, #tpu.dimension_semantics<parallel>], iteration_bounds = array<i64: 2, 1>, scalar_prefetch = 0 : i64, scratch_operands = 0 : i64, tpu.core_type = #tpu.core_type<tc>, window_params = [{transform_indices = @transform_0, window_bounds = array<i64: 4, 16, 16>}, {transform_indices = @transform_1, window_bounds = array<i64: 4, 5, 5>}]} {
    %c0 = arith.constant 0 : index
    %c0_0 = arith.constant 0 : index
    %c0_1 = arith.constant 0 : index
    %0 = vector.load %arg2[%c0, %c0_0, %c0_1] : memref<4x16x16xf32, #tpu.memory_space<vmem>>, vector<4x16x16xf32>
    %1 = vector.extract_strided_slice %0 {offsets = [0, 0, 0], sizes = [4, 1, 16], strides = [1, 1, 1]} : vector<4x16x16xf32> to vector<4x1x16xf32>
    %2 = vector.shape_cast %1 : vector<4x1x16xf32> to vector<4x16xf32>
    %3 = vector.extract_strided_slice %0 {offsets = [0, 1, 0], sizes = [4, 1, 16], strides = [1, 1, 1]} : vector<4x16x16xf32> to vector<4x1x16xf32>
    %4 = vector.shape_cast %3 : vector<4x1x16xf32> to vector<4x16xf32>
    %5 = arith.maximumf %2, %4 : vector<4x16xf32>
    %6 = vector.extract_strided_slice %0 {offsets = [0, 2, 0], sizes = [4, 1, 16], strides = [1, 1, 1]} : vector<4x16x16xf32> to vector<4x1x16xf32>
    %7 = vector.shape_cast %6 : vector<4x1x16xf32> to vector<4x16xf32>
    %8 = arith.maximumf %5, %7 : vector<4x16xf32>
    %9 = vector.extract_strided_slice %0 {offsets = [0, 3, 0], sizes = [4, 1, 16], strides = [1, 1, 1]} : vector<4x16x16xf32> to vector<4x1x16xf32>
    %10 = vector.shape_cast %9 : vector<4x1x16xf32> to vector<4x16xf32>
    %11 = vector.extract_strided_slice %0 {offsets = [0, 4, 0], sizes = [4, 1, 16], strides = [1, 1, 1]} : vector<4x16x16xf32> to vector<4x1x16xf32>
    %12 = vector.shape_cast %11 : vector<4x1x16xf32> to vector<4x16xf32>
    %13 = arith.maximumf %10, %12 : vector<4x16xf32>
    %14 = vector.extract_strided_slice %0 {offsets = [0, 5, 0], sizes = [4, 1, 16], strides = [1, 1, 1]} : vector<4x16x16xf32> to vector<4x1x16xf32>
    %15 = vector.shape_cast %14 : vector<4x1x16xf32> to vector<4x16xf32>
    %16 = arith.maximumf %13, %15 : vector<4x16xf32>
    %17 = vector.extract_strided_slice %0 {offsets = [0, 6, 0], sizes = [4, 1, 16], strides = [1, 1, 1]} : vector<4x16x16xf32> to vector<4x1x16xf32>
    %18 = vector.shape_cast %17 : vector<4x1x16xf32> to vector<4x16xf32>
    %19 = vector.extract_strided_slice %0 {offsets = [0, 7, 0], sizes = [4, 1, 16], strides = [1, 1, 1]} : vector<4x16x16xf32> to vector<4x1x16xf32>
    %20 = vector.shape_cast %19 : vector<4x1x16xf32> to vector<4x16xf32>
    %21 = arith.maximumf %18, %20 : vector<4x16xf32>
    %22 = vector.extract_strided_slice %0 {offsets = [0, 8, 0], sizes = [4, 1, 16], strides = [1, 1, 1]} : vector<4x16x16xf32> to vector<4x1x16xf32>
    %23 = vector.shape_cast %22 : vector<4x1x16xf32> to vector<4x16xf32>
    %24 = arith.maximumf %21, %23 : vector<4x16xf32>
    %25 = vector.extract_strided_slice %0 {offsets = [0, 9, 0], sizes = [4, 1, 16], strides = [1, 1, 1]} : vector<4x16x16xf32> to vector<4x1x16xf32>
    %26 = vector.shape_cast %25 : vector<4x1x16xf32> to vector<4x16xf32>
    %27 = vector.extract_strided_slice %0 {offsets = [0, 10, 0], sizes = [4, 1, 16], strides = [1, 1, 1]} : vector<4x16x16xf32> to vector<4x1x16xf32>
    %28 = vector.shape_cast %27 : vector<4x1x16xf32> to vector<4x16xf32>
    %29 = arith.maximumf %26, %28 : vector<4x16xf32>
    %30 = vector.extract_strided_slice %0 {offsets = [0, 11, 0], sizes = [4, 1, 16], strides = [1, 1, 1]} : vector<4x16x16xf32> to vector<4x1x16xf32>
    %31 = vector.shape_cast %30 : vector<4x1x16xf32> to vector<4x16xf32>
    %32 = arith.maximumf %29, %31 : vector<4x16xf32>
    %33 = vector.extract_strided_slice %0 {offsets = [0, 12, 0], sizes = [4, 1, 16], strides = [1, 1, 1]} : vector<4x16x16xf32> to vector<4x1x16xf32>
    %34 = vector.shape_cast %33 : vector<4x1x16xf32> to vector<4x16xf32>
    %35 = vector.extract_strided_slice %0 {offsets = [0, 13, 0], sizes = [4, 1, 16], strides = [1, 1, 1]} : vector<4x16x16xf32> to vector<4x1x16xf32>
    %36 = vector.shape_cast %35 : vector<4x1x16xf32> to vector<4x16xf32>
    %37 = arith.maximumf %34, %36 : vector<4x16xf32>
    %38 = vector.extract_strided_slice %0 {offsets = [0, 14, 0], sizes = [4, 1, 16], strides = [1, 1, 1]} : vector<4x16x16xf32> to vector<4x1x16xf32>
    %39 = vector.shape_cast %38 : vector<4x1x16xf32> to vector<4x16xf32>
    %40 = arith.maximumf %37, %39 : vector<4x16xf32>
    %41 = tpu.concatenate %8, %16, %24, %32, %40 in 0 : vector<4x16xf32>, vector<4x16xf32>, vector<4x16xf32>, vector<4x16xf32>, vector<4x16xf32> -> vector<20x16xf32>
    %42 = tpu.iota {dimensions = array<i32: 0>} : vector<16x5xi32>
    %43 = tpu.iota {dimensions = array<i32: 1>} : vector<16x5xi32>
    %c3_i32 = arith.constant 3 : i32
    %44 = vector.broadcast %c3_i32 : i32 to vector<16x5xi32>
    %45 = arith.muli %44, %43 : vector<16x5xi32>
    %c0_i32 = arith.constant 0 : i32
    %46 = vector.broadcast %c0_i32 : i32 to vector<16x5xi32>
    %47 = arith.addi %45, %46 : vector<16x5xi32>
    %48 = arith.cmpi eq, %42, %47 : vector<16x5xi32>
    %49 = arith.extui %48 : vector<16x5xi1> to vector<16x5xi32>
    %50 = arith.sitofp %49 : vector<16x5xi32> to vector<16x5xf32>
    %cst = arith.constant dense<0.000000e+00> : vector<20x5xf32>
    %51 = tpu.matmul %41, %50, %cst {dimension_numbers = #tpu.dot_dimension_numbers<[1], [0], [0], [1], [0, 0, 1, 1], [], []>} : vector<20x16xf32>, vector<16x5xf32>, vector<20x5xf32> -> vector<20x5xf32>
    %c3_i32_2 = arith.constant 3 : i32
    %52 = vector.broadcast %c3_i32_2 : i32 to vector<16x5xi32>
    %53 = arith.muli %52, %43 : vector<16x5xi32>
    %c1_i32 = arith.constant 1 : i32
    %54 = vector.broadcast %c1_i32 : i32 to vector<16x5xi32>
    %55 = arith.addi %53, %54 : vector<16x5xi32>
    %56 = arith.cmpi eq, %42, %55 : vector<16x5xi32>
    %57 = arith.extui %56 : vector<16x5xi1> to vector<16x5xi32>
    %58 = arith.sitofp %57 : vector<16x5xi32> to vector<16x5xf32>
    %cst_3 = arith.constant dense<0.000000e+00> : vector<20x5xf32>
    %59 = tpu.matmul %41, %58, %cst_3 {dimension_numbers = #tpu.dot_dimension_numbers<[1], [0], [0], [1], [0, 0, 1, 1], [], []>} : vector<20x16xf32>, vector<16x5xf32>, vector<20x5xf32> -> vector<20x5xf32>
    %60 = arith.maximumf %51, %59 : vector<20x5xf32>
    %c3_i32_4 = arith.constant 3 : i32
    %61 = vector.broadcast %c3_i32_4 : i32 to vector<16x5xi32>
    %62 = arith.muli %61, %43 : vector<16x5xi32>
    %c2_i32 = arith.constant 2 : i32
    %63 = vector.broadcast %c2_i32 : i32 to vector<16x5xi32>
    %64 = arith.addi %62, %63 : vector<16x5xi32>
    %65 = arith.cmpi eq, %42, %64 : vector<16x5xi32>
    %66 = arith.extui %65 : vector<16x5xi1> to vector<16x5xi32>
    %67 = arith.sitofp %66 : vector<16x5xi32> to vector<16x5xf32>
    %cst_5 = arith.constant dense<0.000000e+00> : vector<20x5xf32>
    %68 = tpu.matmul %41, %67, %cst_5 {dimension_numbers = #tpu.dot_dimension_numbers<[1], [0], [0], [1], [0, 0, 1, 1], [], []>} : vector<20x16xf32>, vector<16x5xf32>, vector<20x5xf32> -> vector<20x5xf32>
    %69 = arith.maximumf %60, %68 : vector<20x5xf32>
    %70 = vector.extract_strided_slice %69 {offsets = [0, 0], sizes = [4, 5], strides = [1, 1]} : vector<20x5xf32> to vector<4x5xf32>
    %c0_6 = arith.constant 0 : index
    %c0_7 = arith.constant 0 : index
    %c0_8 = arith.constant 0 : index
    %71 = vector.load %arg3[%c0_6, %c0_7, %c0_8] : memref<4x5x5xf32, #tpu.memory_space<vmem>>, vector<4x1x5xf32>
    %72 = vector.shape_cast %71 : vector<4x1x5xf32> to vector<4x5xf32>
    %73 = vector.shape_cast %70 : vector<4x5xf32> to vector<4x1x5xf32>
    tpu.vector_store %arg3[%c0_6, %c0_7, %c0_8], %73 {strides = array<i32>} : memref<4x5x5xf32, #tpu.memory_space<vmem>>, vector<4x1x5xf32>,
    %74 = vector.extract_strided_slice %69 {offsets = [4, 0], sizes = [4, 5], strides = [1, 1]} : vector<20x5xf32> to vector<4x5xf32>
    %c0_9 = arith.constant 0 : index
    %c1 = arith.constant 1 : index
    %c0_10 = arith.constant 0 : index
    %75 = vector.load %arg3[%c0_9, %c1, %c0_10] : memref<4x5x5xf32, #tpu.memory_space<vmem>>, vector<4x1x5xf32>
    %76 = vector.shape_cast %75 : vector<4x1x5xf32> to vector<4x5xf32>
    %77 = vector.shape_cast %74 : vector<4x5xf32> to vector<4x1x5xf32>
    tpu.vector_store %arg3[%c0_9, %c1, %c0_10], %77 {strides = array<i32>} : memref<4x5x5xf32, #tpu.memory_space<vmem>>, vector<4x1x5xf32>,
    %78 = vector.extract_strided_slice %69 {offsets = [8, 0], sizes = [4, 5], strides = [1, 1]} : vector<20x5xf32> to vector<4x5xf32>
    %c0_11 = arith.constant 0 : index
    %c2 = arith.constant 2 : index
    %c0_12 = arith.constant 0 : index
    %79 = vector.load %arg3[%c0_11, %c2, %c0_12] : memref<4x5x5xf32, #tpu.memory_space<vmem>>, vector<4x1x5xf32>
    %80 = vector.shape_cast %79 : vector<4x1x5xf32> to vector<4x5xf32>
    %81 = vector.shape_cast %78 : vector<4x5xf32> to vector<4x1x5xf32>
    tpu.vector_store %arg3[%c0_11, %c2, %c0_12], %81 {strides = array<i32>} : memref<4x5x5xf32, #tpu.memory_space<vmem>>, vector<4x1x5xf32>,
    %82 = vector.extract_strided_slice %69 {offsets = [12, 0], sizes = [4, 5], strides = [1, 1]} : vector<20x5xf32> to vector<4x5xf32>
    %c0_13 = arith.constant 0 : index
    %c3 = arith.constant 3 : index
    %c0_14 = arith.constant 0 : index
    %83 = vector.load %arg3[%c0_13, %c3, %c0_14] : memref<4x5x5xf32, #tpu.memory_space<vmem>>, vector<4x1x5xf32>
    %84 = vector.shape_cast %83 : vector<4x1x5xf32> to vector<4x5xf32>
    %85 = vector.shape_cast %82 : vector<4x5xf32> to vector<4x1x5xf32>
    tpu.vector_store %arg3[%c0_13, %c3, %c0_14], %85 {strides = array<i32>} : memref<4x5x5xf32, #tpu.memory_space<vmem>>, vector<4x1x5xf32>,
    %86 = vector.extract_strided_slice %69 {offsets = [16, 0], sizes = [4, 5], strides = [1, 1]} : vector<20x5xf32> to vector<4x5xf32>
    %c0_15 = arith.constant 0 : index
    %c4 = arith.constant 4 : index
    %c0_16 = arith.constant 0 : index
    %87 = vector.load %arg3[%c0_15, %c4, %c0_16] : memref<4x5x5xf32, #tpu.memory_space<vmem>>, vector<4x1x5xf32>
    %88 = vector.shape_cast %87 : vector<4x1x5xf32> to vector<4x5xf32>
    %89 = vector.shape_cast %86 : vector<4x5xf32> to vector<4x1x5xf32>
    tpu.vector_store %arg3[%c0_15, %c4, %c0_16], %89 {strides = array<i32>} : memref<4x5x5xf32, #tpu.memory_space<vmem>>, vector<4x1x5xf32>,
    return
  }
  func.func @transform_0(%arg0: i32, %arg1: i32) -> (i32, i32, i32) {
    %c0_i32 = arith.constant 0 : i32
    %c0_i32_0 = arith.constant 0 : i32
    return %arg0, %arg1, %c0_i32 : i32, i32, i32
  }
  func.func @transform_1(%arg0: i32, %arg1: i32) -> (i32, i32, i32) {
    %c0_i32 = arith.constant 0 : i32
    %c0_i32_0 = arith.constant 0 : i32
    return %arg0, %arg1, %c0_i32 : i32, i32, i32
  }
}

</mosaic_0001>

<llo_original>
// kernel: tpu_custom_call.1
$region0: #{tpu_custom_call.1}
  #allocation0 [shape = 'u32[]', space=smem, size = 0x4, offset = 0x4, fixed_abs, tag = 'smem constant byte address 0x4 - core index']
  #allocation1 [shape = 'u32[144,128]{1,0:T(1,128)}', space=vmem, size = 0x12000, scoped, tag = 'internal scratch']
  %s0 = inlined_call_operand.hbm [shape: f32[8,16,16], index: 0, kind: input, shape index: {}]
  %s1 = inlined_call_operand.vmem [shape: f32[8,5,5], index: 1, kind: output, shape index: {}]
  %s2 = sld [smem:[#allocation0]]
  $region41: #{tpu_custom_call.1} parent=0
    _
  %s4 = ssub.s32 1, %s2
  %s5 = scalar_select 0, %s4, %s2
  $region1: #{tpu_custom_call.1} parent=0
    #allocation2 [shape = 'u8[65536]{0}', space=vmem, size = 0x10000, scoped, tag = 'input window, operand 0']
    #allocation3 [shape = 's32[2]{0}', space=sflag, size = 0x8, scoped, tag = 'scoped memory for tpu_custom_call.1']
    %6 = vsyncpa [#allocation3], 0
    %s7 = scalar_lea.sflag [#allocation3], 1
    %8 = vsyncpa %s7, 0
    loop: start=0, step=1, limit=4
    $region2: #{tpu_custom_call.1} parent=1 // loop_pre_header
      _
    $region3: #{tpu_custom_call.1} parent=1 // loop_header
      %s10 = sphi 0, %s14
      %p11 = scmp.ge.s32.totalorder %s10, 4
      %s17 = sphi 0, %s29
      %s18 = sphi 0, %s25
      %s19 = sphi 0, %s17
      %s20 = sphi 0, %s18
      %s21 = sphi 0, %s19
      %s22 = sphi 0, %s20
      %s34 = sphi 0, %s36
      %s37 = sphi 0, %s34
      %s38 = sphi 0, %s37
      %s54 = sphi 0, %s38
      %s62 = sphi 0, %s64
      %s65 = sphi 0, %s62
      %s66 = sphi 0, %s65
      %s82 = sphi 0, %s66
    $region4: #{tpu_custom_call.1} parent=1 // loop_header_branch
      %13 = sbr.rel (%p11) target = $region8
    $region5: #{tpu_custom_call.1} parent=1 // loop_body
      %s15 = ssub.s32 %s10, 1
      %s16 = ssub.s32 %s10, 2
      %s23 = sadd.s32 1, %s18
      %p24 = scmp.ge.s32.totalorder %s23, 1
      %s25 = scalar_select %p24, 0, %s23
      %s26 = sadd.s32 1, %s17
      %s27 = scalar_select %p24, %s26, %s17
      %p28 = scmp.ge.s32.totalorder %s27, 2
      %s29 = scalar_select %p28, 0, %s27
      %s30 = ssub.s32 %s17, %s29
      %s31 = ssub.s32 %s18, %s25
      %s32 = sor.u32 %s30, %s31
      %p33 = scmp.eq.s32.totalorder %s32, 0
      %s35 = sadd.s32 %s34, 1
      %s36 = scalar_select %p33, %s34, %s35
      %p39 = pneg %p33
      %p40 = scmp.eq.s32.totalorder %s10, 1
      %p41 = por %p39, %p40
      %p42 = scmp.ne.s32.totalorder %s34, %s37
      %p43 = scmp.eq.s32.totalorder %s10, 0
      %p44 = por %p42, %p43
      %p45 = scmp.ne.s32.totalorder %s34, %s37
      %p46 = scmp.eq.s32.totalorder %s15, 1
      %p47 = por %p45, %p46
      %p48 = scmp.ne.s32.totalorder %s37, %s38
      %p49 = scmp.eq.s32.totalorder %s15, 0
      %p50 = por %p48, %p49
      %p51 = scmp.ne.s32.totalorder %s37, %s38
      %p52 = scmp.eq.s32.totalorder %s16, 1
      %p53 = por %p51, %p52
      %p55 = scmp.ne.s32.totalorder %s38, %s54
      %p56 = scmp.eq.s32.totalorder %s16, 0
      %p57 = por %p55, %p56
      %s58 = ssub.s32 %s17, %s29
      %s59 = ssub.s32 %s18, %s25
      %s60 = sor.u32 %s58, %s59
      %p61 = scmp.eq.s32.totalorder %s60, 0
      %s63 = sadd.s32 %s62, 1
      %s64 = scalar_select %p61, %s62, %s63
      %p67 = pneg %p61
      %p68 = scmp.eq.s32.totalorder %s10, 1
      %p69 = por %p67, %p68
      %p70 = scmp.ne.s32.totalorder %s62, %s65
      %p71 = scmp.eq.s32.totalorder %s10, 0
      %p72 = por %p70, %p71
      %p73 = scmp.ne.s32.totalorder %s62, %s65
      %p74 = scmp.eq.s32.totalorder %s15, 1
      %p75 = por %p73, %p74
      %p76 = scmp.ne.s32.totalorder %s65, %s66
      %p77 = scmp.eq.s32.totalorder %s15, 0
      %p78 = por %p76, %p77
      %p79 = scmp.ne.s32.totalorder %s65, %s66
      %p80 = scmp.eq.s32.totalorder %s16, 1
      %p81 = por %p79, %p80
      %p83 = scmp.ne.s32.totalorder %s66, %s82
      %p84 = scmp.eq.s32.totalorder %s16, 0
      %p85 = por %p83, %p84
      %p86 = scmp.le.s32.totalorder 1, %s10
      %p87 = scmp.lt.s32.totalorder %s10, 3
      %p88 = pnand %p86, %p87
      %p89 = pneg %p88
      // Predicated region
      $region9: #{tpu_custom_call.1} parent=5 // pred_check
        _
      $region10: #{tpu_custom_call.1} parent=5 // pred_check_branch
        %91 = sbr.rel (%p88) target = $region12
      $region11: #{tpu_custom_call.1} parent=5 // pred_region
        %s92 = ssub.s32 %s10, 1
      $region12: #{tpu_custom_call.1} parent=5 // pred_fallthru
        _
      %p93 = scmp.lt.s32.totalorder %s10, 2
      // Predicated region
      $region13: #{tpu_custom_call.1} parent=5 // pred_check
        %p94 = pneg %p93
      $region14: #{tpu_custom_call.1} parent=5 // pred_check_branch
        %96 = sbr.rel (%p94) target = $region16
      $region15: #{tpu_custom_call.1} parent=5 // pred_region
        // Predicated region
        $region17: #{tpu_custom_call.1} parent=15 // pred_check
          %p97 = pneg %p44
        $region18: #{tpu_custom_call.1} parent=15 // pred_check_branch
          %99 = sbr.rel (%p97) target = $region20
        $region19: #{tpu_custom_call.1} parent=15 // pred_region
          %s100 = sand.u32 %s34, 1
          %s101 = scalar_lea.sflag [#allocation3], %s100
          %s102 = sand.u32 %s34, 1
          %s103 = smul.addr %s102, 64
          %s104 = scalar_lea.vmem [#allocation2], %s103
          %s105 = smul.u32 4, %s17
          %s106 = smul.u32 2, %s18
          %s108 = ssub.s32 1024, 1024
          %109 = vsyncadd %s101, %s108
          %s110 = smul.addr %s105, 2
          %s111 = sadd.s32 %s106, %s110
          %s112 = smul.addr %s111, 128
          %s113 = scalar_lea.hbm %s0, %s112
          %s114 = sshll.u32 %s104, 4
          %s115 = int_to_ptr.vmem [resolvable:$true] %s114
          %120 = dma.hbm_to_vmem [thread:$0]  %s113, 1024, %s115, %s101, 128, 128, 8
        $region20: #{tpu_custom_call.1} parent=15 // pred_fallthru
          _
      $region16: #{tpu_custom_call.1} parent=5 // pred_fallthru
        _
      %p121 = scmp.le.s32.totalorder 1, %s10
      %p122 = scmp.lt.s32.totalorder %s10, 3
      %p123 = pnand %p121, %p122
      %p124 = pneg %p123
      // Predicated region
      $region21: #{tpu_custom_call.1} parent=5 // pred_check
        _
      $region22: #{tpu_custom_call.1} parent=5 // pred_check_branch
        %126 = sbr.rel (%p123) target = $region24
      $region23: #{tpu_custom_call.1} parent=5 // pred_region
        %s127 = ssub.s32 %s10, 1
        %s128 = sand.u32 %s37, 1
        %s129 = scalar_lea.sflag [#allocation3], %s128
        %s130 = sand.u32 %s37, 1
        %s131 = smul.addr %s130, 64
        %s132 = scalar_lea.vmem [#allocation2], %s131
        // Predicated region
        $region25: #{tpu_custom_call.1} parent=23 // pred_check
          %p133 = pneg %p50
        $region26: #{tpu_custom_call.1} parent=23 // pred_check_branch
          %135 = sbr.rel (%p133) target = $region28
        $region27: #{tpu_custom_call.1} parent=23 // pred_region
          %136 = dma.done %s129, 1024
        $region28: #{tpu_custom_call.1} parent=23 // pred_fallthru
          _
        %s137 = sand.u32 %s37, 1
        %s138 = scalar_lea.sflag [#allocation3], %s137
        %s139 = sand.u32 %s37, 1
        %s140 = smul.addr %s139, 64
        %s141 = scalar_lea.vmem [#allocation2], %s140
        %p142 = pneg %p50
        %p143 = pneg %p47
        %p144 = pneg %p78
        %p145 = pneg %p75
        %s146 = smul.u32 4, %s19
        %p147 = scmp.lt.s32.totalorder %s146, 7
        %s148 = scalar_select %p147, %s146, 7
        %p149 = scmp.lt.s32.totalorder %s20, 0
        %s150 = scalar_select %p149, %s20, 0
        %s151 = sadd.s32 %s150, %s148
        %s152 = smul.addr %s151, 8
        %s153 = scalar_lea.vmem %s1, %s152
        %s154 = smul.u32 4, %s19
        %s155 = smul.u32 2, %s20
        %s156 = smul.u32 4, %s19
        %p157 = scmp.lt.s32.totalorder %s156, 7
        %s158 = scalar_select %p157, %s156, 7
        %p159 = scmp.lt.s32.totalorder %s20, 0
        %s160 = scalar_select %p159, %s20, 0
        %s161 = sadd.s32 %s160, %s158
        %s162 = smul.addr %s161, 8
        %s163 = scalar_lea.vmem %s1, %s162
        %s164 = smul.u32 4, %s19
        %v165 = vld [vmem:[%s132] sm:$0xff]
        %v166 = vld [vmem:[%s132 + $0x8] sm:$0xff]
        %v167 = vld [vmem:[%s132 + $0x10] sm:$0xff]
        %v168 = vld [vmem:[%s132 + $0x18] sm:$0xff]
        %v169 = vld [vmem:[%s132 + $0x20] sm:$0xff]
        %v170 = vld [vmem:[%s132 + $0x28] sm:$0xff]
        %v171 = vld [vmem:[%s132 + $0x30] sm:$0xff]
        %v172 = vld [vmem:[%s132 + $0x38] sm:$0xff]
        %v177 = vrot.slane %v165, 1
        %v178 = vrot.slane %v167, 1
        %v179 = vrot.slane %v169, 1
        %v180 = vrot.slane %v171, 1
        %v185 = vmax.f32 %v165, %v177
        %v186 = vmax.f32 %v167, %v178
        %v187 = vmax.f32 %v169, %v179
        %v188 = vmax.f32 %v171, %v180
        %v189 = vrot.slane %v165, 2
        %v190 = vrot.slane %v167, 2
        %v191 = vrot.slane %v169, 2
        %v192 = vrot.slane %v171, 2
        %v197 = vmax.f32 %v185, %v189
        %v198 = vmax.f32 %v186, %v190
        %v199 = vmax.f32 %v187, %v191
        %v200 = vmax.f32 %v188, %v192
        %v205 = vrot.slane %v166, 2
        %v206 = vrot.slane %v168, 2
        %v207 = vrot.slane %v170, 2
        %v208 = vrot.slane %v172, 2
        %v213 = vmax.f32 %v185, %v205
        %v214 = vmax.f32 %v186, %v206
        %v215 = vmax.f32 %v187, %v207
        %v216 = vmax.f32 %v188, %v208
        %v217 = vrot.slane %v166, 1
        %v218 = vrot.slane %v168, 1
        %v219 = vrot.slane %v170, 1
        %v220 = vrot.slane %v172, 1
        %v225 = vmax.f32 %v166, %v217
        %v226 = vmax.f32 %v168, %v218
        %v227 = vmax.f32 %v170, %v219
        %v228 = vmax.f32 %v172, %v220
        %v229 = vmax.f32 %v225, %v205
        %v230 = vmax.f32 %v226, %v206
        %v231 = vmax.f32 %v227, %v207
        %v232 = vmax.f32 %v228, %v208
        %v237 = vrot.slane %v198, 7
        %vm238 = vcmask 1041409
        %v239 = vsel %vm238, %v237, %v197
        %v240 = vrot.slane %v199, 6
        %vm241 = vcmask 1042434
        %v242 = vsel %vm241, %v240, %v239
        %v243 = vrot.slane %v200, 5
        %vm244 = vcmask 1043459
        %v245 = vsel %vm244, %v243, %v242
        %v247 = vrot.slane %v197, 7
        %v248 = vrot.slane %v198, 6
        %vm249 = vcmask 1045509
        %v250 = vsel %vm249, %v248, %v247
        %v251 = vrot.slane %v199, 5
        %vm252 = vcmask 1046534
        %v253 = vsel %vm252, %v251, %v250
        %v254 = vrot.slane %v200, 4
        %vm255 = vcmask 1047559
        %v256 = vsel %vm255, %v254, %v253
        %v262 = vrot.slane %v213, 6
        %v263 = vrot.slane %v214, 5
        %v264 = vsel %vm238, %v263, %v262
        %v265 = vrot.slane %v215, 4
        %v266 = vsel %vm241, %v265, %v264
        %v267 = vrot.slane %v216, 3
        %v268 = vsel %vm244, %v267, %v266
        %v274 = vrot.slane %v229, 5
        %v275 = vrot.slane %v230, 4
        %v276 = vsel %vm249, %v275, %v274
        %v277 = vrot.slane %v231, 3
        %v278 = vsel %vm252, %v277, %v276
        %v279 = vrot.slane %v232, 2
        %v280 = vsel %vm255, %v279, %v278
        %v282 = vrot.slane %v229, 4
        %v283 = vrot.slane %v230, 3
        %v284 = vsel %vm238, %v283, %v282
        %v285 = vrot.slane %v231, 2
        %v286 = vsel %vm241, %v285, %v284
        %v287 = vrot.slane %v232, 1
        %v288 = vsel %vm244, %v287, %v286
        %vm289 = vcmask 1043456
        %v290 = vsel %vm289, %v245, %v256
        %v291 = vsel %vm289, %v268, %v280
        %v292 = vlaneseq
        %v293 = vshrl.u32 %v292, 7
        %v294 = vadd.s32 %v293, 8
        %v295 = vlaneseq
        %v296 = vand.u32 %v295, 127
        %v297 = vmul.u32 %v296, 3
        %vm298 = vcmp.eq.s32.totalorder %v293, %v297
        %vm299 = vcmp.eq.s32.totalorder %v294, %v297
        %v300 = vsel %vm298, 1, 0
        %v301 = vsel %vm299, 1, 0
        %v302 = vcvt.s32.f32 %v300
        %v303 = vcvt.s32.f32 %v301
        %vm304 = vcmask 130048
        %v306 = vsel %vm304, %v290, 0
        %v309 = vsel %vm304, %v291, 0
        %v311 = vsel %vm304, %v288, 0
        %313 = vmatprep.subr.mxu0 0.0
        %314 = vmatpush1.msra.mxu0 %v302
        %315 = vmatprep.subr.mxu0 0.0
        %316 = vmatpush1.msra.mxu0 %v303
        %317 = vmatprep.subr.mxu0 0.0
        %318 = vmatpush1.msra.mxu0 0.0
        %319 = vmatprep.subr.mxu0 0.0
        %320 = vmatpush1.msra.mxu0 0.0
        %321 = vmatprep.subr.mxu0 0.0
        %322 = vmatpush1.msra.mxu0 0.0
        %323 = vmatprep.subr.mxu0 0.0
        %324 = vmatpush1.msra.mxu0 0.0
        %325 = vmatprep.subr.mxu0 0.0
        %326 = vmatpush1.msra.mxu0 0.0
        %327 = vmatprep.subr.mxu0 0.0
        %328 = vmatpush1.msra.mxu0 0.0
        %329 = vmatprep.subr.mxu0 0.0
        %330 = vmatpush1.msra.mxu0 0.0
        %331 = vmatprep.subr.mxu0 0.0
        %332 = vmatpush1.msra.mxu0 0.0
        %333 = vmatprep.subr.mxu0 0.0
        %334 = vmatpush1.msra.mxu0 0.0
        %335 = vmatprep.subr.mxu0 0.0
        %336 = vmatpush1.msra.mxu0 0.0
        %337 = vmatprep.subr.mxu0 0.0
        %338 = vmatpush1.msra.mxu0 0.0
        %339 = vmatprep.subr.mxu0 0.0
        %340 = vmatpush1.msra.mxu0 0.0
        %341 = vmatprep.subr.mxu0 0.0
        %342 = vmatpush1.msra.mxu0 0.0
        %343 = vmatprep.subr.mxu0 0.0
        %344 = vmatpush1.msra.mxu0 0.0
        %345 = vmatprep.subr.mxu0 0.0
        %346 = vmatpush1.msra.mxu0 0.0
        %347 = vmatprep.subr.mxu0 0.0
        %348 = vmatpush1.msra.mxu0 0.0
        %349 = vmatprep.subr.mxu0 0.0
        %350 = vmatpush1.msra.mxu0 0.0
        %351 = vmatprep.subr.mxu0 0.0
        %352 = vmatpush1.msra.mxu0 0.0
        %353 = vmatprep.subr.mxu0 0.0
        %354 = vmatpush1.msra.mxu0 0.0
        %355 = vmatprep.subr.mxu0 0.0
        %356 = vmatpush1.msra.mxu0 0.0
        %357 = vmatprep.subr.mxu0 0.0
        %358 = vmatpush1.msra.mxu0 0.0
        %359 = vmatprep.subr.mxu0 0.0
        %360 = vmatpush1.msra.mxu0 0.0
        %361 = vmatprep.subr.mxu0 0.0
        %362 = vmatpush1.msra.mxu0 0.0
        %363 = vmatprep.subr.mxu0 0.0
        %364 = vmatpush1.msra.mxu0 0.0
        %365 = vmatprep.subr.mxu0 0.0
        %366 = vmatpush1.msra.mxu0 0.0
        %367 = vmatprep.subr.mxu0 0.0
        %368 = vmatpush1.msra.mxu0 0.0
        %369 = vmatprep.subr.mxu0 0.0
        %370 = vmatpush1.msra.mxu0 0.0
        %371 = vmatprep.subr.mxu0 0.0
        %372 = vmatpush1.msra.mxu0 0.0
        %373 = vmatprep.subr.mxu0 0.0
        %374 = vmatpush1.msra.mxu0 0.0
        %375 = vmatprep.subr.mxu0 0.0
        %376 = vmatpush1.msra.mxu0 0.0
        %377 = vmatprep.mubr.f32.mxu0 0.0
        %378 = vmatmul.mubr.f32.gmra.mrb[0].mxu0 %v306
        %v379 = vpop.f32.mrb[0].mxu0
        %v380 = vadd.f32 0.0, %v379
        %v381 = vpop.f32.mrb[0].mxu0
        %382 = vmatprep.mubr.f32.mxu0 0.0
        %383 = vmatmul.mubr.f32.gmra.mrb[0].mxu0 %v309
        %v384 = vpop.f32.mrb[0].mxu0
        %v385 = vadd.f32 0.0, %v384
        %v386 = vpop.f32.mrb[0].mxu0
        %387 = vmatprep.mubr.f32.mxu0 0.0
        %388 = vmatmul.mubr.f32.gmra.mrb[0].mxu0 %v311
        %v389 = vpop.f32.mrb[0].mxu0
        %v390 = vadd.f32 0.0, %v389
        %v391 = vpop.f32.mrb[0].mxu0
        %392 = vdwg.mxu0
        %v393 = vadd.s32 %v297, 1
        %vm394 = vcmp.eq.s32.totalorder %v293, %v393
        %vm395 = vcmp.eq.s32.totalorder %v294, %v393
        %v396 = vsel %vm394, 1, 0
        %v397 = vsel %vm395, 1, 0
        %v398 = vcvt.s32.f32 %v396
        %v399 = vcvt.s32.f32 %v397
        %400 = vmatprep.subr.mxu0 0.0
        %401 = vmatpush1.msra.mxu0 %v398
        %402 = vmatprep.subr.mxu0 0.0
        %403 = vmatpush1.msra.mxu0 %v399
        %404 = vmatprep.subr.mxu0 0.0
        %405 = vmatpush1.msra.mxu0 0.0
        %406 = vmatprep.subr.mxu0 0.0
        %407 = vmatpush1.msra.mxu0 0.0
        %408 = vmatprep.subr.mxu0 0.0
        %409 = vmatpush1.msra.mxu0 0.0
        %410 = vmatprep.subr.mxu0 0.0
        %411 = vmatpush1.msra.mxu0 0.0
        %412 = vmatprep.subr.mxu0 0.0
        %413 = vmatpush1.msra.mxu0 0.0
        %414 = vmatprep.subr.mxu0 0.0
        %415 = vmatpush1.msra.mxu0 0.0
        %416 = vmatprep.subr.mxu0 0.0
        %417 = vmatpush1.msra.mxu0 0.0
        %418 = vmatprep.subr.mxu0 0.0
        %419 = vmatpush1.msra.mxu0 0.0
        %420 = vmatprep.subr.mxu0 0.0
        %421 = vmatpush1.msra.mxu0 0.0
        %422 = vmatprep.subr.mxu0 0.0
        %423 = vmatpush1.msra.mxu0 0.0
        %424 = vmatprep.subr.mxu0 0.0
        %425 = vmatpush1.msra.mxu0 0.0
        %426 = vmatprep.subr.mxu0 0.0
        %427 = vmatpush1.msra.mxu0 0.0
        %428 = vmatprep.subr.mxu0 0.0
        %429 = vmatpush1.msra.mxu0 0.0
        %430 = vmatprep.subr.mxu0 0.0
        %431 = vmatpush1.msra.mxu0 0.0
        %432 = vmatprep.subr.mxu0 0.0
        %433 = vmatpush1.msra.mxu0 0.0
        %434 = vmatprep.subr.mxu0 0.0
        %435 = vmatpush1.msra.mxu0 0.0
        %436 = vmatprep.subr.mxu0 0.0
        %437 = vmatpush1.msra.mxu0 0.0
        %438 = vmatprep.subr.mxu0 0.0
        %439 = vmatpush1.msra.mxu0 0.0
        %440 = vmatprep.subr.mxu0 0.0
        %441 = vmatpush1.msra.mxu0 0.0
        %442 = vmatprep.subr.mxu0 0.0
        %443 = vmatpush1.msra.mxu0 0.0
        %444 = vmatprep.subr.mxu0 0.0
        %445 = vmatpush1.msra.mxu0 0.0
        %446 = vmatprep.subr.mxu0 0.0
        %447 = vmatpush1.msra.mxu0 0.0
        %448 = vmatprep.subr.mxu0 0.0
        %449 = vmatpush1.msra.mxu0 0.0
        %450 = vmatprep.subr.mxu0 0.0
        %451 = vmatpush1.msra.mxu0 0.0
        %452 = vmatprep.subr.mxu0 0.0
        %453 = vmatpush1.msra.mxu0 0.0
        %454 = vmatprep.subr.mxu0 0.0
        %455 = vmatpush1.msra.mxu0 0.0
        %456 = vmatprep.subr.mxu0 0.0
        %457 = vmatpush1.msra.mxu0 0.0
        %458 = vmatprep.subr.mxu0 0.0
        %459 = vmatpush1.msra.mxu0 0.0
        %460 = vmatprep.subr.mxu0 0.0
        %461 = vmatpush1.msra.mxu0 0.0
        %462 = vmatprep.subr.mxu0 0.0
        %463 = vmatpush1.msra.mxu0 0.0
        %464 = vmatprep.mubr.f32.mxu0 0.0
        %465 = vmatmul.mubr.f32.gmra.mrb[0].mxu0 %v306
        %v466 = vpop.f32.mrb[0].mxu0
        %v467 = vadd.f32 0.0, %v466
        %v468 = vpop.f32.mrb[0].mxu0
        %469 = vmatprep.mubr.f32.mxu0 0.0
        %470 = vmatmul.mubr.f32.gmra.mrb[0].mxu0 %v309
        %v471 = vpop.f32.mrb[0].mxu0
        %v472 = vadd.f32 0.0, %v471
        %v473 = vpop.f32.mrb[0].mxu0
        %474 = vmatprep.mubr.f32.mxu0 0.0
        %475 = vmatmul.mubr.f32.gmra.mrb[0].mxu0 %v311
        %v476 = vpop.f32.mrb[0].mxu0
        %v477 = vadd.f32 0.0, %v476
        %v478 = vpop.f32.mrb[0].mxu0
        %479 = vdwg.mxu0
        %v480 = vmax.f32 %v380, %v467
        %v481 = vmax.f32 %v385, %v472
        %v482 = vmax.f32 %v390, %v477
        %v483 = vadd.s32 %v297, 2
        %vm484 = vcmp.eq.s32.totalorder %v293, %v483
        %vm485 = vcmp.eq.s32.totalorder %v294, %v483
        %v486 = vsel %vm484, 1, 0
        %v487 = vsel %vm485, 1, 0
        %v488 = vcvt.s32.f32 %v486
        %v489 = vcvt.s32.f32 %v487
        %490 = vmatprep.subr.mxu0 0.0
        %491 = vmatpush1.msra.mxu0 %v488
        %492 = vmatprep.subr.mxu0 0.0
        %493 = vmatpush1.msra.mxu0 %v489
        %494 = vmatprep.subr.mxu0 0.0
        %495 = vmatpush1.msra.mxu0 0.0
        %496 = vmatprep.subr.mxu0 0.0
        %497 = vmatpush1.msra.mxu0 0.0
        %498 = vmatprep.subr.mxu0 0.0
        %499 = vmatpush1.msra.mxu0 0.0
        %500 = vmatprep.subr.mxu0 0.0
        %501 = vmatpush1.msra.mxu0 0.0
        %502 = vmatprep.subr.mxu0 0.0
        %503 = vmatpush1.msra.mxu0 0.0
        %504 = vmatprep.subr.mxu0 0.0
        %505 = vmatpush1.msra.mxu0 0.0
        %506 = vmatprep.subr.mxu0 0.0
        %507 = vmatpush1.msra.mxu0 0.0
        %508 = vmatprep.subr.mxu0 0.0
        %509 = vmatpush1.msra.mxu0 0.0
        %510 = vmatprep.subr.mxu0 0.0
        %511 = vmatpush1.msra.mxu0 0.0
        %512 = vmatprep.subr.mxu0 0.0
        %513 = vmatpush1.msra.mxu0 0.0
        %514 = vmatprep.subr.mxu0 0.0
        %515 = vmatpush1.msra.mxu0 0.0
        %516 = vmatprep.subr.mxu0 0.0
        %517 = vmatpush1.msra.mxu0 0.0
        %518 = vmatprep.subr.mxu0 0.0
        %519 = vmatpush1.msra.mxu0 0.0
        %520 = vmatprep.subr.mxu0 0.0
        %521 = vmatpush1.msra.mxu0 0.0
        %522 = vmatprep.subr.mxu0 0.0
        %523 = vmatpush1.msra.mxu0 0.0
        %524 = vmatprep.subr.mxu0 0.0
        %525 = vmatpush1.msra.mxu0 0.0
        %526 = vmatprep.subr.mxu0 0.0
        %527 = vmatpush1.msra.mxu0 0.0
        %528 = vmatprep.subr.mxu0 0.0
        %529 = vmatpush1.msra.mxu0 0.0
        %530 = vmatprep.subr.mxu0 0.0
        %531 = vmatpush1.msra.mxu0 0.0
        %532 = vmatprep.subr.mxu0 0.0
        %533 = vmatpush1.msra.mxu0 0.0
        %534 = vmatprep.subr.mxu0 0.0
        %535 = vmatpush1.msra.mxu0 0.0
        %536 = vmatprep.subr.mxu0 0.0
        %537 = vmatpush1.msra.mxu0 0.0
        %538 = vmatprep.subr.mxu0 0.0
        %539 = vmatpush1.msra.mxu0 0.0
        %540 = vmatprep.subr.mxu0 0.0
        %541 = vmatpush1.msra.mxu0 0.0
        %542 = vmatprep.subr.mxu0 0.0
        %543 = vmatpush1.msra.mxu0 0.0
        %544 = vmatprep.subr.mxu0 0.0
        %545 = vmatpush1.msra.mxu0 0.0
        %546 = vmatprep.subr.mxu0 0.0
        %547 = vmatpush1.msra.mxu0 0.0
        %548 = vmatprep.subr.mxu0 0.0
        %549 = vmatpush1.msra.mxu0 0.0
        %550 = vmatprep.subr.mxu0 0.0
        %551 = vmatpush1.msra.mxu0 0.0
        %552 = vmatprep.subr.mxu0 0.0
        %553 = vmatpush1.msra.mxu0 0.0
        %554 = vmatprep.mubr.f32.mxu0 0.0
        %555 = vmatmul.mubr.f32.gmra.mrb[0].mxu0 %v306
        %v556 = vpop.f32.mrb[0].mxu0
        %v557 = vadd.f32 0.0, %v556
        %v558 = vpop.f32.mrb[0].mxu0
        %559 = vmatprep.mubr.f32.mxu0 0.0
        %560 = vmatmul.mubr.f32.gmra.mrb[0].mxu0 %v309
        %v561 = vpop.f32.mrb[0].mxu0
        %v562 = vadd.f32 0.0, %v561
        %v563 = vpop.f32.mrb[0].mxu0
        %564 = vmatprep.mubr.f32.mxu0 0.0
        %565 = vmatmul.mubr.f32.gmra.mrb[0].mxu0 %v311
        %v566 = vpop.f32.mrb[0].mxu0
        %v567 = vadd.f32 0.0, %v566
        %v568 = vpop.f32.mrb[0].mxu0
        %569 = vdwg.mxu0
        %v570 = vmax.f32 %v480, %v557
        %v571 = vmax.f32 %v481, %v562
        %v572 = vmax.f32 %v482, %v567
        %v575 = vunpack.c.l.s4 1966171168
        %v576 = vunpack.c.0.s8 %v575
        %v577 = vlaneseq
        %v578 = vshrl.u32 %v577, 7
        %v579 = vsub.s32 %v576, %v578
        %v580 = vrot.slane %v570, %v579
        %v581 = vcombine.high %v580, %v580
        %v583 = vunpack.c.l.s4 1966171168
        %v584 = vunpack.c.0.s8 %v583
        %v585 = vlaneseq
        %v586 = vshrl.u32 %v585, 7
        %v587 = vsub.s32 %v584, %v586
        %v588 = vrot.slane %v580, %v587
        %v590 = vunpack.c.l.s4 1966171168
        %v591 = vunpack.c.0.s8 %v590
        %v592 = vlaneseq
        %v593 = vshrl.u32 %v592, 7
        %v594 = vsub.s32 %v591, %v593
        %v595 = vrot.slane %v581, %v594
        %v596 = vcombine.high %v588, %v588
        %v597 = vcombine.high %v595, %v595
        %vm602 = vcmask 32768
        %603 = vst.msk [vmem:[%s163] sm:$0x1] %vm602, %v588
        %604 = vst.msk [vmem:[%s163 + $0x8] sm:$0x1] %vm602, %v595
        %605 = vst.msk [vmem:[%s163 + $0x10] sm:$0x1] %vm602, %v596
        %606 = vst.msk [vmem:[%s163 + $0x18] sm:$0x1] %vm602, %v597
        %v607 = vcombine.high %v570, %v570
        %v609 = vunpack.c.l.s4 1966171168
        %v610 = vunpack.c.0.s8 %v609
        %v611 = vlaneseq
        %v612 = vshrl.u32 %v611, 7
        %v613 = vsub.s32 %v610, %v612
        %v614 = vrot.slane %v607, %v613
        %v615 = vcombine.high %v614, %v614
        %v617 = vunpack.c.l.s4 1966171168
        %v618 = vunpack.c.0.s8 %v617
        %v619 = vlaneseq
        %v620 = vshrl.u32 %v619, 7
        %v621 = vsub.s32 %v618, %v620
        %v622 = vrot.slane %v614, %v621
        %v624 = vunpack.c.l.s4 1966171168
        %v625 = vunpack.c.0.s8 %v624
        %v626 = vlaneseq
        %v627 = vshrl.u32 %v626, 7
        %v628 = vsub.s32 %v625, %v627
        %v629 = vrot.slane %v615, %v628
        %v630 = vcombine.high %v622, %v622
        %v631 = vcombine.high %v629, %v629
        %636 = vst.msk [vmem:[%s163 + $0x1] sm:$0x1] %vm602, %v622
        %637 = vst.msk [vmem:[%s163 + $0x9] sm:$0x1] %vm602, %v629
        %638 = vst.msk [vmem:[%s163 + $0x11] sm:$0x1] %vm602, %v630
        %639 = vst.msk [vmem:[%s163 + $0x19] sm:$0x1] %vm602, %v631
        %v642 = vunpack.c.l.s4 1966171168
        %v643 = vunpack.c.0.s8 %v642
        %v644 = vlaneseq
        %v645 = vshrl.u32 %v644, 7
        %v646 = vsub.s32 %v643, %v645
        %v647 = vrot.slane %v571, %v646
        %v648 = vcombine.high %v647, %v647
        %v650 = vunpack.c.l.s4 1966171168
        %v651 = vunpack.c.0.s8 %v650
        %v652 = vlaneseq
        %v653 = vshrl.u32 %v652, 7
        %v654 = vsub.s32 %v651, %v653
        %v655 = vrot.slane %v647, %v654
        %v657 = vunpack.c.l.s4 1966171168
        %v658 = vunpack.c.0.s8 %v657
        %v659 = vlaneseq
        %v660 = vshrl.u32 %v659, 7
        %v661 = vsub.s32 %v658, %v660
        %v662 = vrot.slane %v648, %v661
        %v663 = vcombine.high %v655, %v655
        %v664 = vcombine.high %v662, %v662
        %669 = vst.msk [vmem:[%s163 + $0x2] sm:$0x1] %vm602, %v655
        %670 = vst.msk [vmem:[%s163 + $0xa] sm:$0x1] %vm602, %v662
        %671 = vst.msk [vmem:[%s163 + $0x12] sm:$0x1] %vm602, %v663
        %672 = vst.msk [vmem:[%s163 + $0x1a] sm:$0x1] %vm602, %v664
        %v673 = vcombine.high %v571, %v571
        %v675 = vunpack.c.l.s4 1966171168
        %v676 = vunpack.c.0.s8 %v675
        %v677 = vlaneseq
        %v678 = vshrl.u32 %v677, 7
        %v679 = vsub.s32 %v676, %v678
        %v680 = vrot.slane %v673, %v679
        %v681 = vcombine.high %v680, %v680
        %v683 = vunpack.c.l.s4 1966171168
        %v684 = vunpack.c.0.s8 %v683
        %v685 = vlaneseq
        %v686 = vshrl.u32 %v685, 7
        %v687 = vsub.s32 %v684, %v686
        %v688 = vrot.slane %v680, %v687
        %v690 = vunpack.c.l.s4 1966171168
        %v691 = vunpack.c.0.s8 %v690
        %v692 = vlaneseq
        %v693 = vshrl.u32 %v692, 7
        %v694 = vsub.s32 %v691, %v693
        %v695 = vrot.slane %v681, %v694
        %v696 = vcombine.high %v688, %v688
        %v697 = vcombine.high %v695, %v695
        %702 = vst.msk [vmem:[%s163 + $0x3] sm:$0x1] %vm602, %v688
        %703 = vst.msk [vmem:[%s163 + $0xb] sm:$0x1] %vm602, %v695
        %704 = vst.msk [vmem:[%s163 + $0x13] sm:$0x1] %vm602, %v696
        %705 = vst.msk [vmem:[%s163 + $0x1b] sm:$0x1] %vm602, %v697
        %v708 = vunpack.c.l.s4 1966171168
        %v709 = vunpack.c.0.s8 %v708
        %v710 = vlaneseq
        %v711 = vshrl.u32 %v710, 7
        %v712 = vsub.s32 %v709, %v711
        %v713 = vrot.slane %v572, %v712
        %v714 = vcombine.high %v713, %v713
        %v716 = vunpack.c.l.s4 1966171168
        %v717 = vunpack.c.0.s8 %v716
        %v718 = vlaneseq
        %v719 = vshrl.u32 %v718, 7
        %v720 = vsub.s32 %v717, %v719
        %v721 = vrot.slane %v713, %v720
        %v723 = vunpack.c.l.s4 1966171168
        %v724 = vunpack.c.0.s8 %v723
        %v725 = vlaneseq
        %v726 = vshrl.u32 %v725, 7
        %v727 = vsub.s32 %v724, %v726
        %v728 = vrot.slane %v714, %v727
        %v729 = vcombine.high %v721, %v721
        %v730 = vcombine.high %v728, %v728
        %735 = vst.msk [vmem:[%s163 + $0x4] sm:$0x1] %vm602, %v721
        %736 = vst.msk [vmem:[%s163 + $0xc] sm:$0x1] %vm602, %v728
        %737 = vst.msk [vmem:[%s163 + $0x14] sm:$0x1] %vm602, %v729
        %738 = vst.msk [vmem:[%s163 + $0x1c] sm:$0x1] %vm602, %v730
        %s739 = smul.u32 4, %s19
        %p740 = scmp.lt.s32.totalorder %s739, 7
        %s741 = scalar_select %p740, %s739, 7
        %p742 = scmp.lt.s32.totalorder %s20, 0
        %s743 = scalar_select %p742, %s20, 0
        %s744 = sadd.s32 %s743, %s741
        %s745 = smul.addr %s744, 8
        %s746 = scalar_lea.vmem %s1, %s745
        // Predicated region
        $region29: #{tpu_custom_call.1} parent=23 // pred_check
          %p747 = pneg %p75
        $region30: #{tpu_custom_call.1} parent=23 // pred_check_branch
          %749 = sbr.rel (%p747) target = $region32
        $region31: #{tpu_custom_call.1} parent=23 // pred_region
          %s750 = smul.u32 4, %s19
        $region32: #{tpu_custom_call.1} parent=23 // pred_fallthru
          _
      $region24: #{tpu_custom_call.1} parent=5 // pred_fallthru
        _
      %p751 = scmp.le.s32.totalorder 2, %s10
      // Predicated region
      $region33: #{tpu_custom_call.1} parent=5 // pred_check
        %p752 = pneg %p751
      $region34: #{tpu_custom_call.1} parent=5 // pred_check_branch
        %754 = sbr.rel (%p752) target = $region36
      $region35: #{tpu_custom_call.1} parent=5 // pred_region
        %s755 = ssub.s32 %s10, 2
        // Predicated region
        $region37: #{tpu_custom_call.1} parent=35 // pred_check
          %p756 = pneg %p81
        $region38: #{tpu_custom_call.1} parent=35 // pred_check_branch
          %758 = sbr.rel (%p756) target = $region40
        $region39: #{tpu_custom_call.1} parent=35 // pred_region
          %s759 = smul.u32 4, %s21
          %p760 = scmp.lt.s32.totalorder %s759, 7
          %s761 = scalar_select %p760, %s759, 7
          %p762 = scmp.lt.s32.totalorder %s22, 0
          %s763 = scalar_select %p762, %s22, 0
          %s764 = sadd.s32 %s763, %s761
          %s765 = smul.addr %s764, 8
          %s766 = scalar_lea.vmem %s1, %s765
        $region40: #{tpu_custom_call.1} parent=35 // pred_fallthru
          _
      $region36: #{tpu_custom_call.1} parent=5 // pred_fallthru
        _
    $region6: #{tpu_custom_call.1} parent=1 // loop_footer
      %s14 = sadd.s32 1, %s10
    $region7: #{tpu_custom_call.1} parent=1 // loop_footer_branch
      %9 = sbr.rel target = $region3
    $region8: #{tpu_custom_call.1} parent=1 // loop_exit
      _
    %767 = vsyncpa [#allocation3], 1
    %s768 = scalar_lea.sflag [#allocation3], 1
    %769 = vsyncpa %s768, 1

</llo_original>
